<compile_context>
chip_gen: v7x
topology: tpu7x:2x2x1
jax: 0.10.0
libtpu: 0.0.40
codegen_flags: <defaults>
</compile_context>

<pallas_src>
import functools

import jax
import jax.numpy as jnp
from jax.experimental import pallas as pl
from jax.experimental.pallas import tpu as pltpu

LN_EPS = 1e-5
_INV_SQRT2 = 0.7071067811865476


def _round_up(n, m):
    return ((n + m - 1) // m) * m


def _tpu_info():
    """Returns (vmem_capacity_bytes, has_two_tensorcores) with safe fallbacks."""
    kind = ""
    try:
        kind = jax.devices()[0].device_kind.lower()
    except Exception:
        pass
    two_tc = "v7" in kind                       # v7x: 2 TensorCores per chip
    vmem_cap = None
    try:
        vmem_cap = int(pltpu.get_tpu_info().vmem_capacity_bytes)
    except Exception:
        vmem_cap = None
    if not vmem_cap:
        vmem_cap = (64 << 20) if two_tc else (128 << 20)
    return vmem_cap, two_tc


def _projection_head_kernel(x_ref, w1_ref, b1_ref, w2_ref, b2_ref,
                            gamma_ref, beta_ref, o_ref, acc_ref,
                            *, inv_p, use_bf16_matmul, gelu_approximate):
    k = pl.program_id(1)

    @pl.when(k == 0)
    def _():
        acc_ref[...] = jnp.zeros_like(acc_ref)

    x = x_ref[...]                                        # [TB, TE]
    if use_bf16_matmul:
        x = x.astype(jnp.bfloat16)                        # w1/w2 already bf16 (wrapper)

    # projection: Linear(E -> P), accumulated in f32 on the MXU across E chunks
    acc_ref[...] += jnp.dot(x, w1_ref[...], preferred_element_type=jnp.float32)

    @pl.when(k == pl.num_programs(1) - 1)
    def _():
        projected = acc_ref[...] + b1_ref[...].astype(jnp.float32)

        # GELU: exact erf (PyTorch nn.GELU default) or tanh approx (EUP slot)
        if gelu_approximate:
            h = jax.nn.gelu(projected, approximate=True)
        else:
            h = 0.5 * projected * (1.0 + jax.lax.erf(projected * _INV_SQRT2))
        if use_bf16_matmul:
            h = h.astype(jnp.bfloat16)

        # fc: Linear(P -> P)
        y = jnp.dot(h, w2_ref[...], preferred_element_type=jnp.float32)
        y = y + b2_ref[...].astype(jnp.float32)

        # dropout: identity at inference time
        # TODO(synk): training-mode dropout (random mask + 1/(1-p) scale) not implemented

        # residual
        y = y + projected

        # LayerNorm: fused one-pass moments + rsqrt (EUP), f32 throughout
        s1 = jnp.sum(y, axis=-1, keepdims=True)
        s2 = jnp.sum(y * y, axis=-1, keepdims=True)
        mean = s1 * inv_p
        var = s2 * inv_p - mean * mean
        normed = (y - mean) * jax.lax.rsqrt(var + LN_EPS)
        out = (normed * gamma_ref[...].astype(jnp.float32)
               + beta_ref[...].astype(jnp.float32))
        o_ref[...] = out.astype(o_ref.dtype)


def projection_head(x, w1, b1, w2, b2, gamma, beta, *,
                    block_b=None, e_block=None, use_bf16_matmul=True,
                    gelu_approximate=False, out_dtype=None):
    """CLIP ProjectionHead forward.  x: [B, E]; Linear weights stored as [in, out]."""
    B, E = x.shape
    P = w1.shape[1]
    out_dtype = x.dtype if out_dtype is None else out_dtype

    b1 = b1.reshape(1, P)
    b2 = b2.reshape(1, P)
    gamma = gamma.reshape(1, P)
    beta = beta.reshape(1, P)

    if use_bf16_matmul:
        # Cast weights once (halves resident weight VMEM + weight DMA bytes).
        # In a real module, cast at init so the HBM copy itself is bf16.
        w1 = w1.astype(jnp.bfloat16)
        w2 = w2.astype(jnp.bfloat16)

    in_bpe = jnp.dtype(x.dtype).itemsize
    w_bpe = jnp.dtype(w1.dtype).itemsize
    out_bpe = jnp.dtype(out_dtype).itemsize

    vmem_cap, two_tc = _tpu_info()
    cap = max(min(vmem_cap - (8 << 20), 100 << 20), 16 << 20)   # ~56 MiB v7x, ~100 MiB v5e/v6e

    if block_b is None:
        block_b = 256 if vmem_cap <= (96 << 20) else 512        # bigger tiles on 128 MiB parts

    # --- batch tile ---------------------------------------------------------
    if B <= block_b:
        if two_tc and B > 16:
            # Guarantee >=2 grid steps on the 'parallel' batch axis so both
            # v7x TensorCores get work even for mid-size batches.
            TB = max(8, _round_up(pl.cdiv(B, 2), 8))
        else:
            TB = B                                   # full-B block (always legal)
    else:
        TB = block_b
    nb = pl.cdiv(B, TB)

    # --- contraction (E) tile -----------------------------------------------
    # Split E when resident weights would not fit comfortably, or when there is
    # only a single batch tile (so W1 streaming overlaps its DMA with compute).
    resident_w_bytes = 2 * (E * P + P * P) * w_bpe   # conservatively double-buffered
    TE = E
    if resident_w_bytes > cap // 2 or (nb == 1 and E >= 1024):
        for cand in (512, 256, 128):
            if E % cand == 0:
                TE = cand
                break
    if (e_block is not None and E % e_block == 0
            and (e_block == E or e_block % 128 == 0)):
        TE = e_block                                 # explicit override (tests / tuning)

    # --- VMEM accounting (conservative: weights counted double-buffered) -----
    def est_vmem(tb, te):
        return int(
            2 * tb * te * in_bpe                     # x tiles (double-buffered)
            + 2 * tb * P * out_bpe                   # out tiles (double-buffered)
            + 2 * (te * P + P * P) * w_bpe           # w1 chunk + w2
            + 8 * P * 4                              # b1, b2, gamma, beta
            + tb * P * 4                             # f32 accumulator scratch
            + 6 * tb * P * 4)                        # in-kernel f32 temporaries

    # Never clamp the limit below the requirement: shrink TB instead.
    while est_vmem(TB, TE) > cap and TB > 8:
        TB = max(8, _round_up(max(TB // 2, 8), 8))
    nb = pl.cdiv(B, TB)
    e_steps = E // TE
    grid = (nb, e_steps)

    est = est_vmem(TB, TE)
    vmem_limit = int(min(cap, max(est + (4 << 20), 32 << 20)))
    vmem_limit = int(max(vmem_limit, min(est, vmem_cap - (2 << 20))))

    flops = 2 * B * P * (E + P) + 12 * B * P
    bytes_accessed = (B * E * in_bpe + (E * P + P * P) * w_bpe
                      + 4 * P * 4 + B * P * out_bpe)

    kernel = functools.partial(
        _projection_head_kernel, inv_p=1.0 / P,
        use_bf16_matmul=use_bf16_matmul, gelu_approximate=gelu_approximate)

    def run(single_buffer_params):
        def const_spec(shape):
            # Grid-invariant blocks: a single VMEM buffer is enough (they are
            # fetched once and never re-DMA'd).
            if single_buffer_params:
                return pl.BlockSpec(shape, lambda i, k: (0, 0),
                                    pipeline_mode=pl.Buffered(1))
            return pl.BlockSpec(shape, lambda i, k: (0, 0))

        w1_spec = (const_spec((E, P)) if e_steps == 1
                   else pl.BlockSpec((TE, P), lambda i, k: (k, 0)))

        return pl.pallas_call(
            kernel,
            out_shape=jax.ShapeDtypeStruct((B, P), out_dtype),
            grid=grid,
            in_specs=[
                pl.BlockSpec((TB, TE), lambda i, k: (i, k)),   # x: tiled, pipelined
                w1_spec,                                       # w1: resident or E-streamed
                const_spec((1, P)),                            # b1
                const_spec((P, P)),                            # w2
                const_spec((1, P)),                            # b2
                const_spec((1, P)),                            # gamma
                const_spec((1, P)),                            # beta
            ],
            out_specs=pl.BlockSpec((TB, P), lambda i, k: (i, 0)),
            scratch_shapes=[pltpu.VMEM((TB, P), jnp.float32)],
            compiler_params=pltpu.CompilerParams(
                dimension_semantics=("parallel", "arbitrary"),
                vmem_limit_bytes=vmem_limit),
            cost_estimate=pl.CostEstimate(
                flops=flops,
                transcendentals=B * P,                         # erf / tanh in GELU
                bytes_accessed=bytes_accessed),
        )(x, w1, b1, w2, b2, gamma, beta)

    try:
        return run(True)
    except Exception:
        # Older jax without BlockSpec(pipeline_mode=...): default (double)
        # buffering; the VMEM estimate above already covers it.
        return run(False)


def reference(x, w1, b1, w2, b2, gamma, beta):
    projected = x @ w1 + b1
    h = jax.nn.gelu(projected, approximate=False)
    y = h @ w2 + b2
    y = y + projected
    mean = jnp.mean(y, axis=-1, keepdims=True)
    var = jnp.mean((y - mean) ** 2, axis=-1, keepdims=True)
    return (y - mean) / jnp.sqrt(var + LN_EPS) * gamma + beta


if __name__ == "__main__":
    # small shapes consistent with the module
    B, E, P = 8, 32, 128

    key = jax.random.PRNGKey(0)
    k1, k2, k3, k4, k5, k6, k7 = jax.random.split(key, 7)

    # deterministic synthetic parameters (Linear weights stored as [in, out])
    x = jax.random.normal(k1, (B, E), dtype=jnp.float32)
    w1 = jax.random.normal(k2, (E, P), dtype=jnp.float32) * (E ** -0.5)
    b1 = jax.random.normal(k3, (1, P), dtype=jnp.float32) * 0.01
    w2 = jax.random.normal(k4, (P, P), dtype=jnp.float32) * (P ** -0.5)
    b2 = jax.random.normal(k5, (1, P), dtype=jnp.float32) * 0.01
    gamma = jnp.ones((1, P), dtype=jnp.float32)   # nn.LayerNorm default weight
    beta = jnp.zeros((1, P), dtype=jnp.float32)   # nn.LayerNorm default bias

    ref = reference(x, w1, b1, w2, b2, gamma, beta)

    # 1) default path: bf16 MXU, f32 accumulation + f32 residual/LayerNorm
    out = jax.block_until_ready(projection_head(x, w1, b1, w2, b2, gamma, beta))
    assert out.shape == (B, P) and out.dtype == x.dtype
    assert jnp.allclose(out, ref, atol=5e-2, rtol=5e-2), "bf16 default path mismatch"

    # 2) full-f32 path, tight tolerance
    out_f32 = jax.block_until_ready(
        projection_head(x, w1, b1, w2, b2, gamma, beta, use_bf16_matmul=False))
    assert jnp.allclose(out_f32, ref, atol=2e-4, rtol=2e-4), "f32 path mismatch"

    # 3) ragged batch tiling, no host-side padding (B=20, 8-row tiles, grid=(3, 1))
    B2 = 20
    x2 = jax.random.normal(k6, (B2, E), dtype=jnp.float32)
    out2 = jax.block_until_ready(
        projection_head(x2, w1, b1, w2, b2, gamma, beta,
                        block_b=8, use_bf16_matmul=False))
    ref2 = reference(x2, w1, b1, w2, b2, gamma, beta)
    assert out2.shape == (B2, P)
    assert jnp.allclose(out2, ref2, atol=2e-4, rtol=2e-4), "ragged tiled path mismatch"

    # 4) E-split accumulator path (contraction tiled into 2 chunks, grid=(1, 2))
    E2 = 256
    x3 = jax.random.normal(k7, (B, E2), dtype=jnp.float32)
    w1b = jax.random.normal(k2, (E2, P), dtype=jnp.float32) * (E2 ** -0.5)
    out3 = jax.block_until_ready(
        projection_head(x3, w1b, b1, w2, b2, gamma, beta,
                        e_block=128, use_bf16_matmul=False))
    ref3 = reference(x3, w1b, b1, w2, b2, gamma, beta)
    assert jnp.allclose(out3, ref3, atol=1e-3, rtol=1e-3), "E-split path mismatch"

    print("KERNEL_OK")
</pallas_src>

<mosaic_0001>
module attributes {stable_mosaic.version = 11 : i64} {
  func.func @_projection_head_kernel(%arg0: i32, %arg1: i32, %arg2: memref<8x32xf32, #tpu.memory_space<vmem>>, %arg3: memref<32x128xbf16, #tpu.memory_space<vmem>>, %arg4: memref<1x128xf32, #tpu.memory_space<vmem>>, %arg5: memref<128x128xbf16, #tpu.memory_space<vmem>>, %arg6: memref<1x128xf32, #tpu.memory_space<vmem>>, %arg7: memref<1x128xf32, #tpu.memory_space<vmem>>, %arg8: memref<1x128xf32, #tpu.memory_space<vmem>>, %arg9: memref<8x128xf32, #tpu.memory_space<vmem>>, %arg10: memref<8x128xf32, #tpu.memory_space<vmem>>) attributes {dimension_semantics = [#tpu.dimension_semantics<parallel>, #tpu.dimension_semantics<arbitrary>], iteration_bounds = array<i64: 1, 1>, scalar_prefetch = 0 : i64, scratch_operands = 1 : i64, tpu.core_type = #tpu.core_type<tc>, window_params = [{transform_indices = @transform_0, window_bounds = array<i64: 8, 32>}, {pipeline_mode = #tpu.pipeline_mode<synchronous>, transform_indices = @transform_1, window_bounds = array<i64: 32, 128>}, {pipeline_mode = #tpu.pipeline_mode<synchronous>, transform_indices = @transform_2, window_bounds = array<i64: 1, 128>}, {pipeline_mode = #tpu.pipeline_mode<synchronous>, transform_indices = @transform_3, window_bounds = array<i64: 128, 128>}, {pipeline_mode = #tpu.pipeline_mode<synchronous>, transform_indices = @transform_4, window_bounds = array<i64: 1, 128>}, {pipeline_mode = #tpu.pipeline_mode<synchronous>, transform_indices = @transform_5, window_bounds = array<i64: 1, 128>}, {pipeline_mode = #tpu.pipeline_mode<synchronous>, transform_indices = @transform_6, window_bounds = array<i64: 1, 128>}, {transform_indices = @transform_7, window_bounds = array<i64: 8, 128>}]} {
    %c0_i32 = arith.constant 0 : i32
    %0 = arith.cmpi eq, %arg1, %c0_i32 : i32
    %1 = arith.extui %0 : i1 to i32
    %c0_i32_0 = arith.constant 0 : i32
    %2 = arith.cmpi ne, %1, %c0_i32_0 : i32
    scf.if %2 {
      %cst_10 = arith.constant 0.000000e+00 : f32
      %13 = vector.broadcast %cst_10 : f32 to vector<8x128xf32>
      %c0_11 = arith.constant 0 : index
      %c0_12 = arith.constant 0 : index
      %14 = vector.load %arg10[%c0_11, %c0_12] : memref<8x128xf32, #tpu.memory_space<vmem>>, vector<8x128xf32>
      tpu.vector_store %arg10[%c0_11, %c0_12], %13 {strides = array<i32>} : memref<8x128xf32, #tpu.memory_space<vmem>>, vector<8x128xf32>,
    } else {
    }
    %c0 = arith.constant 0 : index
    %c0_1 = arith.constant 0 : index
    %3 = vector.load %arg2[%c0, %c0_1] : memref<8x32xf32, #tpu.memory_space<vmem>>, vector<8x32xf32>
    %4 = arith.truncf %3 : vector<8x32xf32> to vector<8x32xbf16>
    %c0_2 = arith.constant 0 : index
    %c0_3 = arith.constant 0 : index
    %5 = vector.load %arg10[%c0_2, %c0_3] : memref<8x128xf32, #tpu.memory_space<vmem>>, vector<8x128xf32>
    %c0_4 = arith.constant 0 : index
    %c0_5 = arith.constant 0 : index
    %6 = vector.load %arg3[%c0_4, %c0_5] : memref<32x128xbf16, #tpu.memory_space<vmem>>, vector<32x128xbf16>
    %cst = arith.constant dense<0.000000e+00> : vector<8x128xf32>
    %7 = tpu.matmul %4, %6, %cst {dimension_numbers = #tpu.dot_dimension_numbers<[1], [0], [0], [1], [0, 0, 1, 1], [], []>} : vector<8x32xbf16>, vector<32x128xbf16>, vector<8x128xf32> -> vector<8x128xf32>
    %8 = arith.addf %5, %7 : vector<8x128xf32>
    %c0_6 = arith.constant 0 : index
    %c0_7 = arith.constant 0 : index
    %9 = vector.load %arg10[%c0_6, %c0_7] : memref<8x128xf32, #tpu.memory_space<vmem>>, vector<8x128xf32>
    tpu.vector_store %arg10[%c0_6, %c0_7], %8 {strides = array<i32>} : memref<8x128xf32, #tpu.memory_space<vmem>>, vector<8x128xf32>,
    %c0_i32_8 = arith.constant 0 : i32
    %10 = arith.cmpi eq, %arg1, %c0_i32_8 : i32
    %11 = arith.extui %10 : i1 to i32
    %c0_i32_9 = arith.constant 0 : i32
    %12 = arith.cmpi ne, %11, %c0_i32_9 : i32
    scf.if %12 {
      %c0_10 = arith.constant 0 : index
      %c0_11 = arith.constant 0 : index
      %13 = vector.load %arg10[%c0_10, %c0_11] : memref<8x128xf32, #tpu.memory_space<vmem>>, vector<8x128xf32>
      %c0_12 = arith.constant 0 : index
      %c0_13 = arith.constant 0 : index
      %14 = vector.load %arg4[%c0_12, %c0_13] : memref<1x128xf32, #tpu.memory_space<vmem>>, vector<1x128xf32>
      %15 = vector.broadcast %14 : vector<1x128xf32> to vector<8x128xf32>
      %16 = arith.addf %13, %15 : vector<8x128xf32>
      %cst_14 = arith.constant 5.000000e-01 : f32
      %17 = vector.broadcast %cst_14 : f32 to vector<8x128xf32>
      %18 = arith.mulf %17, %16 : vector<8x128xf32>
      %cst_15 = arith.constant 0.707106769 : f32
      %19 = vector.broadcast %cst_15 : f32 to vector<8x128xf32>
      %20 = arith.mulf %16, %19 : vector<8x128xf32>
      %21 = math.erf %20 : vector<8x128xf32>
      %cst_16 = arith.constant 1.000000e+00 : f32
      %22 = vector.broadcast %cst_16 : f32 to vector<8x128xf32>
      %23 = arith.addf %22, %21 : vector<8x128xf32>
      %24 = arith.mulf %18, %23 : vector<8x128xf32>
      %25 = arith.truncf %24 : vector<8x128xf32> to vector<8x128xbf16>
      %c0_17 = arith.constant 0 : index
      %c0_18 = arith.constant 0 : index
      %26 = vector.load %arg5[%c0_17, %c0_18] : memref<128x128xbf16, #tpu.memory_space<vmem>>, vector<128x128xbf16>
      %cst_19 = arith.constant dense<0.000000e+00> : vector<8x128xf32>
      %27 = tpu.matmul %25, %26, %cst_19 {dimension_numbers = #tpu.dot_dimension_numbers<[1], [0], [0], [1], [0, 0, 1, 1], [], []>} : vector<8x128xbf16>, vector<128x128xbf16>, vector<8x128xf32> -> vector<8x128xf32>
      %c0_20 = arith.constant 0 : index
      %c0_21 = arith.constant 0 : index
      %28 = vector.load %arg6[%c0_20, %c0_21] : memref<1x128xf32, #tpu.memory_space<vmem>>, vector<1x128xf32>
      %29 = vector.broadcast %28 : vector<1x128xf32> to vector<8x128xf32>
      %30 = arith.addf %27, %29 : vector<8x128xf32>
      %31 = arith.addf %30, %16 : vector<8x128xf32>
      %cst_22 = arith.constant dense<0.000000e+00> : vector<8xf32>
      %32 = vector.multi_reduction <add>, %31, %cst_22 [1] : vector<8x128xf32> to vector<8xf32>
      %33 = vector.shape_cast %32 : vector<8xf32> to vector<8x1xf32>
      %34 = arith.mulf %31, %31 : vector<8x128xf32>
      %cst_23 = arith.constant dense<0.000000e+00> : vector<8xf32>
      %35 = vector.multi_reduction <add>, %34, %cst_23 [1] : vector<8x128xf32> to vector<8xf32>
      %36 = vector.shape_cast %35 : vector<8xf32> to vector<8x1xf32>
      %cst_24 = arith.constant 7.812500e-03 : f32
      %37 = vector.broadcast %cst_24 : f32 to vector<8x1xf32>
      %38 = arith.mulf %33, %37 : vector<8x1xf32>
      %cst_25 = arith.constant 7.812500e-03 : f32
      %39 = vector.broadcast %cst_25 : f32 to vector<8x1xf32>
      %40 = arith.mulf %36, %39 : vector<8x1xf32>
      %41 = arith.mulf %38, %38 : vector<8x1xf32>
      %42 = arith.subf %40, %41 : vector<8x1xf32>
      %43 = vector.broadcast %38 : vector<8x1xf32> to vector<8x128xf32>
      %44 = arith.subf %31, %43 : vector<8x128xf32>
      %cst_26 = arith.constant 9.99999974E-6 : f32
      %45 = vector.broadcast %cst_26 : f32 to vector<8x1xf32>
      %46 = arith.addf %42, %45 : vector<8x1xf32>
      %47 = math.rsqrt %46 : vector<8x1xf32>
      %48 = vector.broadcast %47 : vector<8x1xf32> to vector<8x128xf32>
      %49 = arith.mulf %44, %48 : vector<8x128xf32>
      %c0_27 = arith.constant 0 : index
      %c0_28 = arith.constant 0 : index
      %50 = vector.load %arg7[%c0_27, %c0_28] : memref<1x128xf32, #tpu.memory_space<vmem>>, vector<1x128xf32>
      %51 = vector.broadcast %50 : vector<1x128xf32> to vector<8x128xf32>
      %52 = arith.mulf %49, %51 : vector<8x128xf32>
      %c0_29 = arith.constant 0 : index
      %c0_30 = arith.constant 0 : index
      %53 = vector.load %arg8[%c0_29, %c0_30] : memref<1x128xf32, #tpu.memory_space<vmem>>, vector<1x128xf32>
      %54 = vector.broadcast %53 : vector<1x128xf32> to vector<8x128xf32>
      %55 = arith.addf %52, %54 : vector<8x128xf32>
      %c0_31 = arith.constant 0 : index
      %c0_32 = arith.constant 0 : index
      %56 = vector.load %arg9[%c0_31, %c0_32] : memref<8x128xf32, #tpu.memory_space<vmem>>, vector<8x128xf32>
      tpu.vector_store %arg9[%c0_31, %c0_32], %55 {strides = array<i32>} : memref<8x128xf32, #tpu.memory_space<vmem>>, vector<8x128xf32>,
    } else {
    }
    return
  }
  func.func @transform_0(%arg0: i32, %arg1: i32) -> (i32, i32) {
    %c0_i32 = arith.constant 0 : i32
    return %arg0, %arg1 : i32, i32
  }
  func.func @transform_1(%arg0: i32, %arg1: i32) -> (i32, i32) {
    %c0_i32 = arith.constant 0 : i32
    %c0_i32_0 = arith.constant 0 : i32
    %c0_i32_1 = arith.constant 0 : i32
    return %c0_i32, %c0_i32_0 : i32, i32
  }
  func.func @transform_2(%arg0: i32, %arg1: i32) -> (i32, i32) {
    %c0_i32 = arith.constant 0 : i32
    %c0_i32_0 = arith.constant 0 : i32
    %c0_i32_1 = arith.constant 0 : i32
    return %c0_i32, %c0_i32_0 : i32, i32
  }
  func.func @transform_3(%arg0: i32, %arg1: i32) -> (i32, i32) {
    %c0_i32 = arith.constant 0 : i32
    %c0_i32_0 = arith.constant 0 : i32
    %c0_i32_1 = arith.constant 0 : i32
    return %c0_i32, %c0_i32_0 : i32, i32
  }
  func.func @transform_4(%arg0: i32, %arg1: i32) -> (i32, i32) {
    %c0_i32 = arith.constant 0 : i32
    %c0_i32_0 = arith.constant 0 : i32
    %c0_i32_1 = arith.constant 0 : i32
    return %c0_i32, %c0_i32_0 : i32, i32
  }
  func.func @transform_5(%arg0: i32, %arg1: i32) -> (i32, i32) {
    %c0_i32 = arith.constant 0 : i32
    %c0_i32_0 = arith.constant 0 : i32
    %c0_i32_1 = arith.constant 0 : i32
    return %c0_i32, %c0_i32_0 : i32, i32
  }
  func.func @transform_6(%arg0: i32, %arg1: i32) -> (i32, i32) {
    %c0_i32 = arith.constant 0 : i32
    %c0_i32_0 = arith.constant 0 : i32
    %c0_i32_1 = arith.constant 0 : i32
    return %c0_i32, %c0_i32_0 : i32, i32
  }
  func.func @transform_7(%arg0: i32, %arg1: i32) -> (i32, i32) {
    %c0_i32 = arith.constant 0 : i32
    %c0_i32_0 = arith.constant 0 : i32
    return %arg0, %c0_i32 : i32, i32
  }
}

module attributes {stable_mosaic.version = 11 : i64} {
  func.func @_projection_head_kernel(%arg0: i32, %arg1: i32, %arg2: memref<8x32xf32, #tpu.memory_space<vmem>>, %arg3: memref<32x128xbf16, #tpu.memory_space<vmem>>, %arg4: memref<1x128xf32, #tpu.memory_space<vmem>>, %arg5: memref<128x128xbf16, #tpu.memory_space<vmem>>, %arg6: memref<1x128xf32, #tpu.memory_space<vmem>>, %arg7: memref<1x128xf32, #tpu.memory_space<vmem>>, %arg8: memref<1x128xf32, #tpu.memory_space<vmem>>, %arg9: memref<8x128xf32, #tpu.memory_space<vmem>>, %arg10: memref<8x128xf32, #tpu.memory_space<vmem>>) attributes {dimension_semantics = [#tpu.dimension_semantics<parallel>, #tpu.dimension_semantics<arbitrary>], iteration_bounds = array<i64: 1, 1>, scalar_prefetch = 0 : i64, scratch_operands = 1 : i64, tpu.core_type = #tpu.core_type<tc>, window_params = [{transform_indices = @transform_0, window_bounds = array<i64: 8, 32>}, {pipeline_mode = #tpu.pipeline_mode<synchronous>, transform_indices = @transform_1, window_bounds = array<i64: 32, 128>}, {pipeline_mode = #tpu.pipeline_mode<synchronous>, transform_indices = @transform_2, window_bounds = array<i64: 1, 128>}, {pipeline_mode = #tpu.pipeline_mode<synchronous>, transform_indices = @transform_3, window_bounds = array<i64: 128, 128>}, {pipeline_mode = #tpu.pipeline_mode<synchronous>, transform_indices = @transform_4, window_bounds = array<i64: 1, 128>}, {pipeline_mode = #tpu.pipeline_mode<synchronous>, transform_indices = @transform_5, window_bounds = array<i64: 1, 128>}, {pipeline_mode = #tpu.pipeline_mode<synchronous>, transform_indices = @transform_6, window_bounds = array<i64: 1, 128>}, {transform_indices = @transform_7, window_bounds = array<i64: 8, 128>}]} {
    %c0_i32 = arith.constant 0 : i32
    %0 = arith.cmpi eq, %arg1, %c0_i32 : i32
    %1 = arith.extui %0 : i1 to i32
    %c0_i32_0 = arith.constant 0 : i32
    %2 = arith.cmpi ne, %1, %c0_i32_0 : i32
    scf.if %2 {
      %cst_10 = arith.constant 0.000000e+00 : f32
      %13 = vector.broadcast %cst_10 : f32 to vector<8x128xf32>
      %c0_11 = arith.constant 0 : index
      %c0_12 = arith.constant 0 : index
      %14 = vector.load %arg10[%c0_11, %c0_12] : memref<8x128xf32, #tpu.memory_space<vmem>>, vector<8x128xf32>
      tpu.vector_store %arg10[%c0_11, %c0_12], %13 {strides = array<i32>} : memref<8x128xf32, #tpu.memory_space<vmem>>, vector<8x128xf32>,
    } else {
    }
    %c0 = arith.constant 0 : index
    %c0_1 = arith.constant 0 : index
    %3 = vector.load %arg2[%c0, %c0_1] : memref<8x32xf32, #tpu.memory_space<vmem>>, vector<8x32xf32>
    %4 = arith.truncf %3 : vector<8x32xf32> to vector<8x32xbf16>
    %c0_2 = arith.constant 0 : index
    %c0_3 = arith.constant 0 : index
    %5 = vector.load %arg10[%c0_2, %c0_3] : memref<8x128xf32, #tpu.memory_space<vmem>>, vector<8x128xf32>
    %c0_4 = arith.constant 0 : index
    %c0_5 = arith.constant 0 : index
    %6 = vector.load %arg3[%c0_4, %c0_5] : memref<32x128xbf16, #tpu.memory_space<vmem>>, vector<32x128xbf16>
    %cst = arith.constant dense<0.000000e+00> : vector<8x128xf32>
    %7 = tpu.matmul %4, %6, %cst {dimension_numbers = #tpu.dot_dimension_numbers<[1], [0], [0], [1], [0, 0, 1, 1], [], []>} : vector<8x32xbf16>, vector<32x128xbf16>, vector<8x128xf32> -> vector<8x128xf32>
    %8 = arith.addf %5, %7 : vector<8x128xf32>
    %c0_6 = arith.constant 0 : index
    %c0_7 = arith.constant 0 : index
    %9 = vector.load %arg10[%c0_6, %c0_7] : memref<8x128xf32, #tpu.memory_space<vmem>>, vector<8x128xf32>
    tpu.vector_store %arg10[%c0_6, %c0_7], %8 {strides = array<i32>} : memref<8x128xf32, #tpu.memory_space<vmem>>, vector<8x128xf32>,
    %c0_i32_8 = arith.constant 0 : i32
    %10 = arith.cmpi eq, %arg1, %c0_i32_8 : i32
    %11 = arith.extui %10 : i1 to i32
    %c0_i32_9 = arith.constant 0 : i32
    %12 = arith.cmpi ne, %11, %c0_i32_9 : i32
    scf.if %12 {
      %c0_10 = arith.constant 0 : index
      %c0_11 = arith.constant 0 : index
      %13 = vector.load %arg10[%c0_10, %c0_11] : memref<8x128xf32, #tpu.memory_space<vmem>>, vector<8x128xf32>
      %c0_12 = arith.constant 0 : index
      %c0_13 = arith.constant 0 : index
      %14 = vector.load %arg4[%c0_12, %c0_13] : memref<1x128xf32, #tpu.memory_space<vmem>>, vector<1x128xf32>
      %15 = vector.broadcast %14 : vector<1x128xf32> to vector<8x128xf32>
      %16 = arith.addf %13, %15 : vector<8x128xf32>
      %cst_14 = arith.constant 5.000000e-01 : f32
      %17 = vector.broadcast %cst_14 : f32 to vector<8x128xf32>
      %18 = arith.mulf %17, %16 : vector<8x128xf32>
      %cst_15 = arith.constant 0.707106769 : f32
      %19 = vector.broadcast %cst_15 : f32 to vector<8x128xf32>
      %20 = arith.mulf %16, %19 : vector<8x128xf32>
      %21 = math.erf %20 : vector<8x128xf32>
      %cst_16 = arith.constant 1.000000e+00 : f32
      %22 = vector.broadcast %cst_16 : f32 to vector<8x128xf32>
      %23 = arith.addf %22, %21 : vector<8x128xf32>
      %24 = arith.mulf %18, %23 : vector<8x128xf32>
      %25 = arith.truncf %24 : vector<8x128xf32> to vector<8x128xbf16>
      %c0_17 = arith.constant 0 : index
      %c0_18 = arith.constant 0 : index
      %26 = vector.load %arg5[%c0_17, %c0_18] : memref<128x128xbf16, #tpu.memory_space<vmem>>, vector<128x128xbf16>
      %cst_19 = arith.constant dense<0.000000e+00> : vector<8x128xf32>
      %27 = tpu.matmul %25, %26, %cst_19 {dimension_numbers = #tpu.dot_dimension_numbers<[1], [0], [0], [1], [0, 0, 1, 1], [], []>} : vector<8x128xbf16>, vector<128x128xbf16>, vector<8x128xf32> -> vector<8x128xf32>
      %c0_20 = arith.constant 0 : index
      %c0_21 = arith.constant 0 : index
      %28 = vector.load %arg6[%c0_20, %c0_21] : memref<1x128xf32, #tpu.memory_space<vmem>>, vector<1x128xf32>
      %29 = vector.broadcast %28 : vector<1x128xf32> to vector<8x128xf32>
      %30 = arith.addf %27, %29 : vector<8x128xf32>
      %31 = arith.addf %30, %16 : vector<8x128xf32>
      %cst_22 = arith.constant dense<0.000000e+00> : vector<8xf32>
      %32 = vector.multi_reduction <add>, %31, %cst_22 [1] : vector<8x128xf32> to vector<8xf32>
      %33 = vector.shape_cast %32 : vector<8xf32> to vector<8x1xf32>
      %34 = arith.mulf %31, %31 : vector<8x128xf32>
      %cst_23 = arith.constant dense<0.000000e+00> : vector<8xf32>
      %35 = vector.multi_reduction <add>, %34, %cst_23 [1] : vector<8x128xf32> to vector<8xf32>
      %36 = vector.shape_cast %35 : vector<8xf32> to vector<8x1xf32>
      %cst_24 = arith.constant 7.812500e-03 : f32
      %37 = vector.broadcast %cst_24 : f32 to vector<8x1xf32>
      %38 = arith.mulf %33, %37 : vector<8x1xf32>
      %cst_25 = arith.constant 7.812500e-03 : f32
      %39 = vector.broadcast %cst_25 : f32 to vector<8x1xf32>
      %40 = arith.mulf %36, %39 : vector<8x1xf32>
      %41 = arith.mulf %38, %38 : vector<8x1xf32>
      %42 = arith.subf %40, %41 : vector<8x1xf32>
      %43 = vector.broadcast %38 : vector<8x1xf32> to vector<8x128xf32>
      %44 = arith.subf %31, %43 : vector<8x128xf32>
      %cst_26 = arith.constant 9.99999974E-6 : f32
      %45 = vector.broadcast %cst_26 : f32 to vector<8x1xf32>
      %46 = arith.addf %42, %45 : vector<8x1xf32>
      %47 = math.rsqrt %46 : vector<8x1xf32>
      %48 = vector.broadcast %47 : vector<8x1xf32> to vector<8x128xf32>
      %49 = arith.mulf %44, %48 : vector<8x128xf32>
      %c0_27 = arith.constant 0 : index
      %c0_28 = arith.constant 0 : index
      %50 = vector.load %arg7[%c0_27, %c0_28] : memref<1x128xf32, #tpu.memory_space<vmem>>, vector<1x128xf32>
      %51 = vector.broadcast %50 : vector<1x128xf32> to vector<8x128xf32>
      %52 = arith.mulf %49, %51 : vector<8x128xf32>
      %c0_29 = arith.constant 0 : index
      %c0_30 = arith.constant 0 : index
      %53 = vector.load %arg8[%c0_29, %c0_30] : memref<1x128xf32, #tpu.memory_space<vmem>>, vector<1x128xf32>
      %54 = vector.broadcast %53 : vector<1x128xf32> to vector<8x128xf32>
      %55 = arith.addf %52, %54 : vector<8x128xf32>
      %c0_31 = arith.constant 0 : index
      %c0_32 = arith.constant 0 : index
      %56 = vector.load %arg9[%c0_31, %c0_32] : memref<8x128xf32, #tpu.memory_space<vmem>>, vector<8x128xf32>
      tpu.vector_store %arg9[%c0_31, %c0_32], %55 {strides = array<i32>} : memref<8x128xf32, #tpu.memory_space<vmem>>, vector<8x128xf32>,
    } else {
    }
    return
  }
  func.func @transform_0(%arg0: i32, %arg1: i32) -> (i32, i32) {
    %c0_i32 = arith.constant 0 : i32
    return %arg0, %arg1 : i32, i32
  }
  func.func @transform_1(%arg0: i32, %arg1: i32) -> (i32, i32) {
    %c0_i32 = arith.constant 0 : i32
    %c0_i32_0 = arith.constant 0 : i32
    %c0_i32_1 = arith.constant 0 : i32
    return %c0_i32, %c0_i32_0 : i32, i32
  }
  func.func @transform_2(%arg0: i32, %arg1: i32) -> (i32, i32) {
    %c0_i32 = arith.constant 0 : i32
    %c0_i32_0 = arith.constant 0 : i32
    %c0_i32_1 = arith.constant 0 : i32
    return %c0_i32, %c0_i32_0 : i32, i32
  }
  func.func @transform_3(%arg0: i32, %arg1: i32) -> (i32, i32) {
    %c0_i32 = arith.constant 0 : i32
    %c0_i32_0 = arith.constant 0 : i32
    %c0_i32_1 = arith.constant 0 : i32
    return %c0_i32, %c0_i32_0 : i32, i32
  }
  func.func @transform_4(%arg0: i32, %arg1: i32) -> (i32, i32) {
    %c0_i32 = arith.constant 0 : i32
    %c0_i32_0 = arith.constant 0 : i32
    %c0_i32_1 = arith.constant 0 : i32
    return %c0_i32, %c0_i32_0 : i32, i32
  }
  func.func @transform_5(%arg0: i32, %arg1: i32) -> (i32, i32) {
    %c0_i32 = arith.constant 0 : i32
    %c0_i32_0 = arith.constant 0 : i32
    %c0_i32_1 = arith.constant 0 : i32
    return %c0_i32, %c0_i32_0 : i32, i32
  }
  func.func @transform_6(%arg0: i32, %arg1: i32) -> (i32, i32) {
    %c0_i32 = arith.constant 0 : i32
    %c0_i32_0 = arith.constant 0 : i32
    %c0_i32_1 = arith.constant 0 : i32
    return %c0_i32, %c0_i32_0 : i32, i32
  }
  func.func @transform_7(%arg0: i32, %arg1: i32) -> (i32, i32) {
    %c0_i32 = arith.constant 0 : i32
    %c0_i32_0 = arith.constant 0 : i32
    return %arg0, %c0_i32 : i32, i32
  }
}

</mosaic_0001>

<llo_original>
// kernel: tpu_custom_call.1
$region0: #{tpu_custom_call.1}
  #allocation0 [shape = 'u32[]', space=smem, size = 0x4, offset = 0x4, fixed_abs, tag = 'smem constant byte address 0x4 - core index']
  #allocation1 [shape = 'u32[144,128]{1,0:T(1,128)}', space=vmem, size = 0x12000, scoped, tag = 'internal scratch']
  #allocation2 [shape = 'f32[8,128]{1,0:T(8,128)}', space=vmem, size = 0x1000, scoped, tag = 'scratch operand']
  %s0 = inlined_call_operand.hbm [shape: f32[8,32], index: 0, kind: input, shape index: {}]
  %s1 = inlined_call_operand.hbm [shape: bf16[32,128], index: 1, kind: input, shape index: {}]
  %s2 = inlined_call_operand.vmem [shape: f32[1,128], index: 2, kind: input, shape index: {}]
  %s3 = inlined_call_operand.hbm [shape: bf16[128,128], index: 3, kind: input, shape index: {}]
  %s4 = inlined_call_operand.vmem [shape: f32[1,128], index: 4, kind: input, shape index: {}]
  %s5 = inlined_call_operand.vmem [shape: f32[1,128], index: 5, kind: input, shape index: {}]
  %s6 = inlined_call_operand.vmem [shape: f32[1,128], index: 6, kind: input, shape index: {}]
  %s7 = inlined_call_operand.hbm [shape: f32[8,128], index: 7, kind: output, shape index: {}]
  %s8 = sld [smem:[#allocation0]]
  $region58: #{tpu_custom_call.1} parent=0
    _
  %s10 = ssub.s32 1, %s8
  %s11 = scalar_select 0, %s10, %s8
  $region1: #{tpu_custom_call.1} parent=0
    #allocation3 [shape = 'u8[4096]{0}', space=vmem, size = 0x1000, scoped, tag = 'input window, operand 0, single buffered']
    #allocation4 [shape = 's32[1]{0}', space=sflag, size = 0x4, scoped, tag = 'scoped memory for tpu_custom_call.1']
    #allocation5 [shape = 's32[1]{0}', space=sflag, size = 0x4, scoped, tag = 'scoped memory for tpu_custom_call.1']
    #allocation6 [shape = 'u8[8192]{0}', space=vmem, size = 0x2000, scoped, tag = 'input window, operand 1, single buffered']
    #allocation7 [shape = 's32[1]{0}', space=sflag, size = 0x4, scoped, tag = 'scoped memory for tpu_custom_call.1']
    #allocation8 [shape = 'u8[32768]{0}', space=vmem, size = 0x8000, scoped, tag = 'input window, operand 3, single buffered']
    #allocation9 [shape = 'u8[4096]{0}', space=vmem, size = 0x1000, scoped, tag = 'output window, operand 0, single buffered']
    %12 = vsyncpa [#allocation4], 0
    %13 = vsyncpa [#allocation7], 0
    %14 = vsyncpa [#allocation5], 0
    // Predicated region
    $region2: #{tpu_custom_call.1} parent=1 // pred_check
      _
    $region3: #{tpu_custom_call.1} parent=1 // pred_check_branch
      %16 = sbr.rel (0) target = $region5
    $region4: #{tpu_custom_call.1} parent=1 // pred_region
      %s18 = ssub.s32 128, 128
      %19 = vsyncadd [#allocation4], %s18
      %s21 = sshll.u32 [#allocation3], 4
      %s22 = int_to_ptr.vmem [resolvable:$true] %s21
      %24 = dma.hbm_to_vmem [thread:$0]  %s0, 128, %s22, [#allocation4]
    $region5: #{tpu_custom_call.1} parent=1 // pred_fallthru
      _
    // Predicated region
    $region6: #{tpu_custom_call.1} parent=1 // pred_check
      _
    $region7: #{tpu_custom_call.1} parent=1 // pred_check_branch
      %26 = sbr.rel (0) target = $region9
    $region8: #{tpu_custom_call.1} parent=1 // pred_region
      %s28 = ssub.s32 256, 256
      %29 = vsyncadd [#allocation7], %s28
      %s30 = sshll.u32 [#allocation6], 4
      %s31 = int_to_ptr.vmem [resolvable:$true] %s30
      %36 = dma.hbm_to_vmem [thread:$0]  %s1, 256, %s31, [#allocation7], 64, 64, 4
    $region9: #{tpu_custom_call.1} parent=1 // pred_fallthru
      _
    // Predicated region
    $region10: #{tpu_custom_call.1} parent=1 // pred_check
      _
    $region11: #{tpu_custom_call.1} parent=1 // pred_check_branch
      %38 = sbr.rel (0) target = $region13
    $region12: #{tpu_custom_call.1} parent=1 // pred_region
      _
    $region13: #{tpu_custom_call.1} parent=1 // pred_fallthru
      _
    // Predicated region
    $region14: #{tpu_custom_call.1} parent=1 // pred_check
      _
    $region15: #{tpu_custom_call.1} parent=1 // pred_check_branch
      %40 = sbr.rel (0) target = $region17
    $region16: #{tpu_custom_call.1} parent=1 // pred_region
      %s42 = ssub.s32 1024, 1024
      %43 = vsyncadd [#allocation7], %s42
      %s44 = sshll.u32 [#allocation8], 4
      %s45 = int_to_ptr.vmem [resolvable:$true] %s44
      %50 = dma.hbm_to_vmem [thread:$0]  %s3, 1024, %s45, [#allocation7], 64, 64, 4
    $region17: #{tpu_custom_call.1} parent=1 // pred_fallthru
      _
    // Predicated region
    $region18: #{tpu_custom_call.1} parent=1 // pred_check
      _
    $region19: #{tpu_custom_call.1} parent=1 // pred_check_branch
      %52 = sbr.rel (0) target = $region21
    $region20: #{tpu_custom_call.1} parent=1 // pred_region
      _
    $region21: #{tpu_custom_call.1} parent=1 // pred_fallthru
      _
    // Predicated region
    $region22: #{tpu_custom_call.1} parent=1 // pred_check
      _
    $region23: #{tpu_custom_call.1} parent=1 // pred_check_branch
      %54 = sbr.rel (0) target = $region25
    $region24: #{tpu_custom_call.1} parent=1 // pred_region
      _
    $region25: #{tpu_custom_call.1} parent=1 // pred_fallthru
      _
    // Predicated region
    $region26: #{tpu_custom_call.1} parent=1 // pred_check
      _
    $region27: #{tpu_custom_call.1} parent=1 // pred_check_branch
      %56 = sbr.rel (0) target = $region29
    $region28: #{tpu_custom_call.1} parent=1 // pred_region
      _
    $region29: #{tpu_custom_call.1} parent=1 // pred_fallthru
      _
    // Predicated region
    $region30: #{tpu_custom_call.1} parent=1 // pred_check
      _
    $region31: #{tpu_custom_call.1} parent=1 // pred_check_branch
      %58 = sbr.rel (0) target = $region33
    $region32: #{tpu_custom_call.1} parent=1 // pred_region
      %59 = dma.done [#allocation4], 128
    $region33: #{tpu_custom_call.1} parent=1 // pred_fallthru
      _
    // Predicated region
    $region34: #{tpu_custom_call.1} parent=1 // pred_check
      _
    $region35: #{tpu_custom_call.1} parent=1 // pred_check_branch
      %61 = sbr.rel (0) target = $region37
    $region36: #{tpu_custom_call.1} parent=1 // pred_region
      %62 = dma.done [#allocation7], 256
    $region37: #{tpu_custom_call.1} parent=1 // pred_fallthru
      _
    // Predicated region
    $region38: #{tpu_custom_call.1} parent=1 // pred_check
      _
    $region39: #{tpu_custom_call.1} parent=1 // pred_check_branch
      %64 = sbr.rel (0) target = $region41
    $region40: #{tpu_custom_call.1} parent=1 // pred_region
      %65 = dma.done [#allocation7], 1024
    $region41: #{tpu_custom_call.1} parent=1 // pred_fallthru
      _
    %p67 = scmp.eq.s32.totalorder 0, 0
    // Predicated region
    $region42: #{tpu_custom_call.1} parent=1 // pred_check
      %p68 = pneg %p67
    $region43: #{tpu_custom_call.1} parent=1 // pred_check_branch
      %70 = sbr.rel (%p68) target = $region45
    $region44: #{tpu_custom_call.1} parent=1 // pred_region
      %71 = vst [vmem:[#allocation2] sm:$0xff] 0.0
    $region45: #{tpu_custom_call.1} parent=1 // pred_fallthru
      _
    %v72 = vld [vmem:[#allocation3] sm:$0xff]
    %v73 = vpack.c.bf16 %v72, %v72
    %v74 = vld [vmem:[#allocation2] sm:$0xff]
    %v75 = vld [vmem:[#allocation6] sm:$0xf]
    %v76 = vld [vmem:[#allocation6 + $0x4] sm:$0xf]
    %v77 = vld [vmem:[#allocation6 + $0x8] sm:$0xf]
    %v78 = vld [vmem:[#allocation6 + $0xc] sm:$0xf]
    %v83 = vunpack.c.l.b16 %v75
    %v84 = vunpack.c.l.b16 %v76
    %v85 = vunpack.c.l.b16 %v77
    %v86 = vunpack.c.l.b16 %v78
    %v87 = vpack.c.b16 %v84, %v83
    %v88 = vpack.c.b16 %v86, %v85
    %vm91 = vcmask 261120
    %v93 = vsel %vm91, %v73, 0
    %95 = vmatprep.subr.bf16.mxu0 0
    %96 = vmatpush1.bf16.msra.mxu0 %v87
    %97 = vmatprep.subr.bf16.mxu0 0
    %98 = vmatpush1.bf16.msra.mxu0 %v88
    %99 = vmatprep.subr.bf16.mxu0 0
    %100 = vmatpush1.bf16.msra.mxu0 0
    %101 = vmatprep.subr.bf16.mxu0 0
    %102 = vmatpush1.bf16.msra.mxu0 0
    %103 = vmatprep.subr.bf16.mxu0 0
    %104 = vmatpush1.bf16.msra.mxu0 0
    %105 = vmatprep.subr.bf16.mxu0 0
    %106 = vmatpush1.bf16.msra.mxu0 0
    %107 = vmatprep.subr.bf16.mxu0 0
    %108 = vmatpush1.bf16.msra.mxu0 0
    %109 = vmatprep.subr.bf16.mxu0 0
    %110 = vmatpush1.bf16.msra.mxu0 0
    %111 = vmatprep.subr.bf16.mxu0 0
    %112 = vmatpush1.bf16.msra.mxu0 0
    %113 = vmatprep.subr.bf16.mxu0 0
    %114 = vmatpush1.bf16.msra.mxu0 0
    %115 = vmatprep.subr.bf16.mxu0 0
    %116 = vmatpush1.bf16.msra.mxu0 0
    %117 = vmatprep.subr.bf16.mxu0 0
    %118 = vmatpush1.bf16.msra.mxu0 0
    %119 = vmatprep.subr.bf16.mxu0 0
    %120 = vmatpush1.bf16.msra.mxu0 0
    %121 = vmatprep.subr.bf16.mxu0 0
    %122 = vmatpush1.bf16.msra.mxu0 0
    %123 = vmatprep.subr.bf16.mxu0 0
    %124 = vmatpush1.bf16.msra.mxu0 0
    %125 = vmatprep.subr.bf16.mxu0 0
    %126 = vmatpush1.bf16.msra.mxu0 0
    %127 = vmatprep.mubr.bf16.mxu0 0
    %128 = vmatmul.mubr.bf16.gmra.mrb[0].mxu0 %v93
    %v129 = vpop.f32.mrb[0].mxu0
    %v130 = vadd.f32 0.0, %v129
    %v131 = vpop.f32.mrb[0].mxu0
    %v132 = vpop.f32.mrb[0].mxu0
    %v133 = vpop.f32.mrb[0].mxu0
    %134 = vdwg.mxu0
    %v135 = vadd.f32 %v74, %v130
    %136 = vst [vmem:[#allocation2] sm:$0xff] %v135
    // Predicated region
    $region46: #{tpu_custom_call.1} parent=1 // pred_check
      %p137 = pneg %p67
    $region47: #{tpu_custom_call.1} parent=1 // pred_check_branch
      %139 = sbr.rel (%p137) target = $region49
    $region48: #{tpu_custom_call.1} parent=1 // pred_region
      %v140 = vld [vmem:[#allocation2] sm:$0xff]
      %v141 = vld [vmem:[%s2] sm:$0x1]
      %v143 = vlaneseq
      %v144 = vshrl.u32 %v143, 7
      %v145 = vsub.s32 0, %v144
      %v146 = vrot.slane %v141, %v145
      %v148 = vadd.f32 %v140, %v146
      %v149 = vmul.f32 %v148, 0.5
      %v150 = vmul.f32 %v148, 0.70710677
      %v151 = verf.f32.pop %v150
      %v152 = vadd.f32 %v151, 1.0
      %v153 = vmul.f32 %v149, %v152
      %v154 = vpack.c.bf16 %v153, %v153
      %v155 = vld [vmem:[#allocation8] sm:$0xf]
      %v156 = vld [vmem:[#allocation8 + $0x4] sm:$0xf]
      %v157 = vld [vmem:[#allocation8 + $0x8] sm:$0xf]
      %v158 = vld [vmem:[#allocation8 + $0xc] sm:$0xf]
      %v159 = vld [vmem:[#allocation8 + $0x10] sm:$0xf]
      %v160 = vld [vmem:[#allocation8 + $0x14] sm:$0xf]
      %v161 = vld [vmem:[#allocation8 + $0x18] sm:$0xf]
      %v162 = vld [vmem:[#allocation8 + $0x1c] sm:$0xf]
      %v163 = vld [vmem:[#allocation8 + $0x20] sm:$0xf]
      %v164 = vld [vmem:[#allocation8 + $0x24] sm:$0xf]
      %v165 = vld [vmem:[#allocation8 + $0x28] sm:$0xf]
      %v166 = vld [vmem:[#allocation8 + $0x2c] sm:$0xf]
      %v167 = vld [vmem:[#allocation8 + $0x30] sm:$0xf]
      %v168 = vld [vmem:[#allocation8 + $0x34] sm:$0xf]
      %v169 = vld [vmem:[#allocation8 + $0x38] sm:$0xf]
      %v170 = vld [vmem:[#allocation8 + $0x3c] sm:$0xf]
      %v171 = vld [vmem:[%s4] sm:$0x1]
      %v173 = vlaneseq
      %v174 = vshrl.u32 %v173, 7
      %v175 = vsub.s32 0, %v174
      %v176 = vrot.slane %v171, %v175
      %v194 = vunpack.c.l.b16 %v155
      %v195 = vunpack.c.l.b16 %v156
      %v196 = vunpack.c.l.b16 %v157
      %v197 = vunpack.c.l.b16 %v158
      %v198 = vunpack.c.l.b16 %v159
      %v199 = vunpack.c.l.b16 %v160
      %v200 = vunpack.c.l.b16 %v161
      %v201 = vunpack.c.l.b16 %v162
      %v202 = vunpack.c.l.b16 %v163
      %v203 = vunpack.c.l.b16 %v164
      %v204 = vunpack.c.l.b16 %v165
      %v205 = vunpack.c.l.b16 %v166
      %v206 = vunpack.c.l.b16 %v167
      %v207 = vunpack.c.l.b16 %v168
      %v208 = vunpack.c.l.b16 %v169
      %v209 = vunpack.c.l.b16 %v170
      %v210 = vpack.c.b16 %v195, %v194
      %v211 = vpack.c.b16 %v197, %v196
      %v212 = vpack.c.b16 %v199, %v198
      %v213 = vpack.c.b16 %v201, %v200
      %v214 = vpack.c.b16 %v203, %v202
      %v215 = vpack.c.b16 %v205, %v204
      %v216 = vpack.c.b16 %v207, %v206
      %v217 = vpack.c.b16 %v209, %v208
      %226 = vmatprep.subr.bf16.mxu0 0
      %227 = vmatpush1.bf16.msra.mxu0 %v210
      %228 = vmatprep.subr.bf16.mxu0 0
      %229 = vmatpush1.bf16.msra.mxu0 %v211
      %230 = vmatprep.subr.bf16.mxu0 0
      %231 = vmatpush1.bf16.msra.mxu0 %v212
      %232 = vmatprep.subr.bf16.mxu0 0
      %233 = vmatpush1.bf16.msra.mxu0 %v213
      %234 = vmatprep.subr.bf16.mxu0 0
      %235 = vmatpush1.bf16.msra.mxu0 %v214
      %236 = vmatprep.subr.bf16.mxu0 0
      %237 = vmatpush1.bf16.msra.mxu0 %v215
      %238 = vmatprep.subr.bf16.mxu0 0
      %239 = vmatpush1.bf16.msra.mxu0 %v216
      %240 = vmatprep.subr.bf16.mxu0 0
      %241 = vmatpush1.bf16.msra.mxu0 %v217
      %242 = vmatprep.subr.bf16.mxu0 0
      %243 = vmatpush1.bf16.msra.mxu0 0
      %244 = vmatprep.subr.bf16.mxu0 0
      %245 = vmatpush1.bf16.msra.mxu0 0
      %246 = vmatprep.subr.bf16.mxu0 0
      %247 = vmatpush1.bf16.msra.mxu0 0
      %248 = vmatprep.subr.bf16.mxu0 0
      %249 = vmatpush1.bf16.msra.mxu0 0
      %250 = vmatprep.subr.bf16.mxu0 0
      %251 = vmatpush1.bf16.msra.mxu0 0
      %252 = vmatprep.subr.bf16.mxu0 0
      %253 = vmatpush1.bf16.msra.mxu0 0
      %254 = vmatprep.subr.bf16.mxu0 0
      %255 = vmatpush1.bf16.msra.mxu0 0
      %256 = vmatprep.subr.bf16.mxu0 0
      %257 = vmatpush1.bf16.msra.mxu0 0
      %258 = vmatprep.mubr.bf16.mxu0 0
      %259 = vmatmul.mubr.bf16.gmra.mrb[0].mxu0 %v154
      %v260 = vpop.f32.mrb[0].mxu0
      %v261 = vadd.f32 %v176, %v260
      %v262 = vpop.f32.mrb[0].mxu0
      %v263 = vpop.f32.mrb[0].mxu0
      %v264 = vpop.f32.mrb[0].mxu0
      %265 = vdwg.mxu0
      %v266 = vadd.f32 %v261, %v148
      %267 = vadd.xlane.f32.xlu0 %v266
      %v268 = vpop.xlane.xlu0 %267
      %v269 = vmul.f32 %v266, %v266
      %270 = vadd.xlane.f32.xlu0 %v269
      %v271 = vpop.xlane.xlu0 %270
      %v272 = vmul.f32 %v268, 0.0078125
      %v273 = vmul.f32 %v271, 0.0078125
      %v274 = vmul.f32 %v272, %v272
      %v275 = vsub.f32 %v273, %v274
      %v276 = vsub.f32 %v266, %v272
      %v277 = vadd.f32 %v275, 1e-05
      %v278 = vrsqrt.pop %v277
      %v279 = vmul.f32 %v276, %v278
      %v280 = vld [vmem:[%s5] sm:$0x1]
      %v282 = vlaneseq
      %v283 = vshrl.u32 %v282, 7
      %v284 = vsub.s32 0, %v283
      %v285 = vrot.slane %v280, %v284
      %v287 = vmul.f32 %v279, %v285
      %v288 = vld [vmem:[%s6] sm:$0x1]
      %v290 = vlaneseq
      %v291 = vshrl.u32 %v290, 7
      %v292 = vsub.s32 0, %v291
      %v293 = vrot.slane %v288, %v292
      %v295 = vadd.f32 %v287, %v293
      %296 = vst [vmem:[#allocation9] sm:$0xff] %v295
    $region49: #{tpu_custom_call.1} parent=1 // pred_fallthru
      _
    // Predicated region
    $region50: #{tpu_custom_call.1} parent=1 // pred_check
      _
    $region51: #{tpu_custom_call.1} parent=1 // pred_check_branch
      %298 = sbr.rel (0) target = $region53
    $region52: #{tpu_custom_call.1} parent=1 // pred_region
      %s300 = ssub.s32 128, 128
      %301 = vsyncadd [#allocation5], %s300
      %s303 = sshll.u32 [#allocation9], 4
      %s304 = int_to_ptr.vmem [resolvable:$true] %s303
      %306 = dma.vmem_to_hbm [thread:$0]  %s304, 128, %s7, [#allocation5]
    $region53: #{tpu_custom_call.1} parent=1 // pred_fallthru
      _
    // Predicated region
    $region54: #{tpu_custom_call.1} parent=1 // pred_check
      _
    $region55: #{tpu_custom_call.1} parent=1 // pred_check_branch
      %308 = sbr.rel (0) target = $region57
    $region56: #{tpu_custom_call.1} parent=1 // pred_region
      %309 = dma.done [#allocation5], 128
    $region57: #{tpu_custom_call.1} parent=1 // pred_fallthru
      _
    %310 = vsyncpa [#allocation4], 1
    %311 = vsyncpa [#allocation7], 1
    %312 = vsyncpa [#allocation5], 1

// kernel: tpu_custom_call.1
$region0: #{tpu_custom_call.1}
  #allocation0 [shape = 'u32[]', space=smem, size = 0x4, offset = 0x4, fixed_abs, tag = 'smem constant byte address 0x4 - core index']
  #allocation1 [shape = 'u32[144,128]{1,0:T(1,128)}', space=vmem, size = 0x12000, scoped, tag = 'internal scratch']
  #allocation2 [shape = 'f32[8,128]{1,0:T(8,128)}', space=vmem, size = 0x1000, scoped, tag = 'scratch operand']
  %s0 = inlined_call_operand.hbm [shape: f32[8,32], index: 0, kind: input, shape index: {}]
  %s1 = inlined_call_operand.hbm [shape: bf16[32,128], index: 1, kind: input, shape index: {}]
  %s2 = inlined_call_operand.vmem [shape: f32[1,128], index: 2, kind: input, shape index: {}]
  %s3 = inlined_call_operand.hbm [shape: bf16[128,128], index: 3, kind: input, shape index: {}]
  %s4 = inlined_call_operand.vmem [shape: f32[1,128], index: 4, kind: input, shape index: {}]
  %s5 = inlined_call_operand.vmem [shape: f32[1,128], index: 5, kind: input, shape index: {}]
  %s6 = inlined_call_operand.vmem [shape: f32[1,128], index: 6, kind: input, shape index: {}]
  %s7 = inlined_call_operand.hbm [shape: f32[8,128], index: 7, kind: output, shape index: {}]
  %s8 = sld [smem:[#allocation0]]
  $region58: #{tpu_custom_call.1} parent=0
    _
  %s10 = ssub.s32 1, %s8
  %s11 = scalar_select 0, %s10, %s8
  $region1: #{tpu_custom_call.1} parent=0
    #allocation3 [shape = 'u8[4096]{0}', space=vmem, size = 0x1000, scoped, tag = 'input window, operand 0, single buffered']
    #allocation4 [shape = 's32[1]{0}', space=sflag, size = 0x4, scoped, tag = 'scoped memory for tpu_custom_call.1']
    #allocation5 [shape = 's32[1]{0}', space=sflag, size = 0x4, scoped, tag = 'scoped memory for tpu_custom_call.1']
    #allocation6 [shape = 'u8[8192]{0}', space=vmem, size = 0x2000, scoped, tag = 'input window, operand 1, single buffered']
    #allocation7 [shape = 's32[1]{0}', space=sflag, size = 0x4, scoped, tag = 'scoped memory for tpu_custom_call.1']
    #allocation8 [shape = 'u8[32768]{0}', space=vmem, size = 0x8000, scoped, tag = 'input window, operand 3, single buffered']
    #allocation9 [shape = 'u8[4096]{0}', space=vmem, size = 0x1000, scoped, tag = 'output window, operand 0, single buffered']
    %12 = vsyncpa [#allocation4], 0
    %13 = vsyncpa [#allocation7], 0
    %14 = vsyncpa [#allocation5], 0
    // Predicated region
    $region2: #{tpu_custom_call.1} parent=1 // pred_check
      _
    $region3: #{tpu_custom_call.1} parent=1 // pred_check_branch
      %16 = sbr.rel (0) target = $region5
    $region4: #{tpu_custom_call.1} parent=1 // pred_region
      %s18 = ssub.s32 128, 128
      %19 = vsyncadd [#allocation4], %s18
      %s21 = sshll.u32 [#allocation3], 4
      %s22 = int_to_ptr.vmem [resolvable:$true] %s21
      %24 = dma.hbm_to_vmem [thread:$0]  %s0, 128, %s22, [#allocation4]
    $region5: #{tpu_custom_call.1} parent=1 // pred_fallthru
      _
    // Predicated region
    $region6: #{tpu_custom_call.1} parent=1 // pred_check
      _
    $region7: #{tpu_custom_call.1} parent=1 // pred_check_branch
      %26 = sbr.rel (0) target = $region9
    $region8: #{tpu_custom_call.1} parent=1 // pred_region
      %s28 = ssub.s32 256, 256
      %29 = vsyncadd [#allocation7], %s28
      %s30 = sshll.u32 [#allocation6], 4
      %s31 = int_to_ptr.vmem [resolvable:$true] %s30
      %36 = dma.hbm_to_vmem [thread:$0]  %s1, 256, %s31, [#allocation7], 64, 64, 4
    $region9: #{tpu_custom_call.1} parent=1 // pred_fallthru
      _
    // Predicated region
    $region10: #{tpu_custom_call.1} parent=1 // pred_check
      _
    $region11: #{tpu_custom_call.1} parent=1 // pred_check_branch
      %38 = sbr.rel (0) target = $region13
    $region12: #{tpu_custom_call.1} parent=1 // pred_region
      _
    $region13: #{tpu_custom_call.1} parent=1 // pred_fallthru
      _
    // Predicated region
    $region14: #{tpu_custom_call.1} parent=1 // pred_check
      _
    $region15: #{tpu_custom_call.1} parent=1 // pred_check_branch
      %40 = sbr.rel (0) target = $region17
    $region16: #{tpu_custom_call.1} parent=1 // pred_region
      %s42 = ssub.s32 1024, 1024
      %43 = vsyncadd [#allocation7], %s42
      %s44 = sshll.u32 [#allocation8], 4
      %s45 = int_to_ptr.vmem [resolvable:$true] %s44
      %50 = dma.hbm_to_vmem [thread:$0]  %s3, 1024, %s45, [#allocation7], 64, 64, 4
    $region17: #{tpu_custom_call.1} parent=1 // pred_fallthru
      _
    // Predicated region
    $region18: #{tpu_custom_call.1} parent=1 // pred_check
      _
    $region19: #{tpu_custom_call.1} parent=1 // pred_check_branch
      %52 = sbr.rel (0) target = $region21
    $region20: #{tpu_custom_call.1} parent=1 // pred_region
      _
    $region21: #{tpu_custom_call.1} parent=1 // pred_fallthru
      _
    // Predicated region
    $region22: #{tpu_custom_call.1} parent=1 // pred_check
      _
    $region23: #{tpu_custom_call.1} parent=1 // pred_check_branch
      %54 = sbr.rel (0) target = $region25
    $region24: #{tpu_custom_call.1} parent=1 // pred_region
      _
    $region25: #{tpu_custom_call.1} parent=1 // pred_fallthru
      _
    // Predicated region
    $region26: #{tpu_custom_call.1} parent=1 // pred_check
      _
    $region27: #{tpu_custom_call.1} parent=1 // pred_check_branch
      %56 = sbr.rel (0) target = $region29
    $region28: #{tpu_custom_call.1} parent=1 // pred_region
      _
    $region29: #{tpu_custom_call.1} parent=1 // pred_fallthru
      _
    // Predicated region
    $region30: #{tpu_custom_call.1} parent=1 // pred_check
      _
    $region31: #{tpu_custom_call.1} parent=1 // pred_check_branch
      %58 = sbr.rel (0) target = $region33
    $region32: #{tpu_custom_call.1} parent=1 // pred_region
      %59 = dma.done [#allocation4], 128
    $region33: #{tpu_custom_call.1} parent=1 // pred_fallthru
      _
    // Predicated region
    $region34: #{tpu_custom_call.1} parent=1 // pred_check
      _
    $region35: #{tpu_custom_call.1} parent=1 // pred_check_branch
      %61 = sbr.rel (0) target = $region37
    $region36: #{tpu_custom_call.1} parent=1 // pred_region
      %62 = dma.done [#allocation7], 256
    $region37: #{tpu_custom_call.1} parent=1 // pred_fallthru
      _
    // Predicated region
    $region38: #{tpu_custom_call.1} parent=1 // pred_check
      _
    $region39: #{tpu_custom_call.1} parent=1 // pred_check_branch
      %64 = sbr.rel (0) target = $region41
    $region40: #{tpu_custom_call.1} parent=1 // pred_region
      %65 = dma.done [#allocation7], 1024
    $region41: #{tpu_custom_call.1} parent=1 // pred_fallthru
      _
    %p67 = scmp.eq.s32.totalorder 0, 0
    // Predicated region
    $region42: #{tpu_custom_call.1} parent=1 // pred_check
      %p68 = pneg %p67
    $region43: #{tpu_custom_call.1} parent=1 // pred_check_branch
      %70 = sbr.rel (%p68) target = $region45
    $region44: #{tpu_custom_call.1} parent=1 // pred_region
      %71 = vst [vmem:[#allocation2] sm:$0xff] 0.0
    $region45: #{tpu_custom_call.1} parent=1 // pred_fallthru
      _
    %v72 = vld [vmem:[#allocation3] sm:$0xff]
    %v73 = vpack.c.bf16 %v72, %v72
    %v74 = vld [vmem:[#allocation2] sm:$0xff]
    %v75 = vld [vmem:[#allocation6] sm:$0xf]
    %v76 = vld [vmem:[#allocation6 + $0x4] sm:$0xf]
    %v77 = vld [vmem:[#allocation6 + $0x8] sm:$0xf]
    %v78 = vld [vmem:[#allocation6 + $0xc] sm:$0xf]
    %v83 = vunpack.c.l.b16 %v75
    %v84 = vunpack.c.l.b16 %v76
    %v85 = vunpack.c.l.b16 %v77
    %v86 = vunpack.c.l.b16 %v78
    %v87 = vpack.c.b16 %v84, %v83
    %v88 = vpack.c.b16 %v86, %v85
    %vm91 = vcmask 261120
    %v93 = vsel %vm91, %v73, 0
    %95 = vmatprep.subr.bf16.mxu0 0
    %96 = vmatpush1.bf16.msra.mxu0 %v87
    %97 = vmatprep.subr.bf16.mxu0 0
    %98 = vmatpush1.bf16.msra.mxu0 %v88
    %99 = vmatprep.subr.bf16.mxu0 0
    %100 = vmatpush1.bf16.msra.mxu0 0
    %101 = vmatprep.subr.bf16.mxu0 0
    %102 = vmatpush1.bf16.msra.mxu0 0
    %103 = vmatprep.subr.bf16.mxu0 0
    %104 = vmatpush1.bf16.msra.mxu0 0
    %105 = vmatprep.subr.bf16.mxu0 0
    %106 = vmatpush1.bf16.msra.mxu0 0
    %107 = vmatprep.subr.bf16.mxu0 0
    %108 = vmatpush1.bf16.msra.mxu0 0
    %109 = vmatprep.subr.bf16.mxu0 0
    %110 = vmatpush1.bf16.msra.mxu0 0
    %111 = vmatprep.subr.bf16.mxu0 0
    %112 = vmatpush1.bf16.msra.mxu0 0
    %113 = vmatprep.subr.bf16.mxu0 0
    %114 = vmatpush1.bf16.msra.mxu0 0
    %115 = vmatprep.subr.bf16.mxu0 0
    %116 = vmatpush1.bf16.msra.mxu0 0
    %117 = vmatprep.subr.bf16.mxu0 0
    %118 = vmatpush1.bf16.msra.mxu0 0
    %119 = vmatprep.subr.bf16.mxu0 0
    %120 = vmatpush1.bf16.msra.mxu0 0
    %121 = vmatprep.subr.bf16.mxu0 0
    %122 = vmatpush1.bf16.msra.mxu0 0
    %123 = vmatprep.subr.bf16.mxu0 0
    %124 = vmatpush1.bf16.msra.mxu0 0
    %125 = vmatprep.subr.bf16.mxu0 0
    %126 = vmatpush1.bf16.msra.mxu0 0
    %127 = vmatprep.mubr.bf16.mxu0 0
    %128 = vmatmul.mubr.bf16.gmra.mrb[0].mxu0 %v93
    %v129 = vpop.f32.mrb[0].mxu0
    %v130 = vadd.f32 0.0, %v129
    %v131 = vpop.f32.mrb[0].mxu0
    %v132 = vpop.f32.mrb[0].mxu0
    %v133 = vpop.f32.mrb[0].mxu0
    %134 = vdwg.mxu0
    %v135 = vadd.f32 %v74, %v130
    %136 = vst [vmem:[#allocation2] sm:$0xff] %v135
    // Predicated region
    $region46: #{tpu_custom_call.1} parent=1 // pred_check
      %p137 = pneg %p67
    $region47: #{tpu_custom_call.1} parent=1 // pred_check_branch
      %139 = sbr.rel (%p137) target = $region49
    $region48: #{tpu_custom_call.1} parent=1 // pred_region
      %v140 = vld [vmem:[#allocation2] sm:$0xff]
      %v141 = vld [vmem:[%s2] sm:$0x1]
      %v143 = vlaneseq
      %v144 = vshrl.u32 %v143, 7
      %v145 = vsub.s32 0, %v144
      %v146 = vrot.slane %v141, %v145
      %v148 = vadd.f32 %v140, %v146
      %v149 = vmul.f32 %v148, 0.5
      %v150 = vmul.f32 %v148, 0.70710677
      %v151 = verf.f32.pop %v150
      %v152 = vadd.f32 %v151, 1.0
      %v153 = vmul.f32 %v149, %v152
      %v154 = vpack.c.bf16 %v153, %v153
      %v155 = vld [vmem:[#allocation8] sm:$0xf]
      %v156 = vld [vmem:[#allocation8 + $0x4] sm:$0xf]
      %v157 = vld [vmem:[#allocation8 + $0x8] sm:$0xf]
      %v158 = vld [vmem:[#allocation8 + $0xc] sm:$0xf]
      %v159 = vld [vmem:[#allocation8 + $0x10] sm:$0xf]
      %v160 = vld [vmem:[#allocation8 + $0x14] sm:$0xf]
      %v161 = vld [vmem:[#allocation8 + $0x18] sm:$0xf]
      %v162 = vld [vmem:[#allocation8 + $0x1c] sm:$0xf]
      %v163 = vld [vmem:[#allocation8 + $0x20] sm:$0xf]
      %v164 = vld [vmem:[#allocation8 + $0x24] sm:$0xf]
      %v165 = vld [vmem:[#allocation8 + $0x28] sm:$0xf]
      %v166 = vld [vmem:[#allocation8 + $0x2c] sm:$0xf]
      %v167 = vld [vmem:[#allocation8 + $0x30] sm:$0xf]
      %v168 = vld [vmem:[#allocation8 + $0x34] sm:$0xf]
      %v169 = vld [vmem:[#allocation8 + $0x38] sm:$0xf]
      %v170 = vld [vmem:[#allocation8 + $0x3c] sm:$0xf]
      %v171 = vld [vmem:[%s4] sm:$0x1]
      %v173 = vlaneseq
      %v174 = vshrl.u32 %v173, 7
      %v175 = vsub.s32 0, %v174
      %v176 = vrot.slane %v171, %v175
      %v194 = vunpack.c.l.b16 %v155
      %v195 = vunpack.c.l.b16 %v156
      %v196 = vunpack.c.l.b16 %v157
      %v197 = vunpack.c.l.b16 %v158
      %v198 = vunpack.c.l.b16 %v159
      %v199 = vunpack.c.l.b16 %v160
      %v200 = vunpack.c.l.b16 %v161
      %v201 = vunpack.c.l.b16 %v162
      %v202 = vunpack.c.l.b16 %v163
      %v203 = vunpack.c.l.b16 %v164
      %v204 = vunpack.c.l.b16 %v165
      %v205 = vunpack.c.l.b16 %v166
      %v206 = vunpack.c.l.b16 %v167
      %v207 = vunpack.c.l.b16 %v168
      %v208 = vunpack.c.l.b16 %v169
      %v209 = vunpack.c.l.b16 %v170
      %v210 = vpack.c.b16 %v195, %v194
      %v211 = vpack.c.b16 %v197, %v196
      %v212 = vpack.c.b16 %v199, %v198
      %v213 = vpack.c.b16 %v201, %v200
      %v214 = vpack.c.b16 %v203, %v202
      %v215 = vpack.c.b16 %v205, %v204
      %v216 = vpack.c.b16 %v207, %v206
      %v217 = vpack.c.b16 %v209, %v208
      %226 = vmatprep.subr.bf16.mxu0 0
      %227 = vmatpush1.bf16.msra.mxu0 %v210
      %228 = vmatprep.subr.bf16.mxu0 0
      %229 = vmatpush1.bf16.msra.mxu0 %v211
      %230 = vmatprep.subr.bf16.mxu0 0
      %231 = vmatpush1.bf16.msra.mxu0 %v212
      %232 = vmatprep.subr.bf16.mxu0 0
      %233 = vmatpush1.bf16.msra.mxu0 %v213
      %234 = vmatprep.subr.bf16.mxu0 0
      %235 = vmatpush1.bf16.msra.mxu0 %v214
      %236 = vmatprep.subr.bf16.mxu0 0
      %237 = vmatpush1.bf16.msra.mxu0 %v215
      %238 = vmatprep.subr.bf16.mxu0 0
      %239 = vmatpush1.bf16.msra.mxu0 %v216
      %240 = vmatprep.subr.bf16.mxu0 0
      %241 = vmatpush1.bf16.msra.mxu0 %v217
      %242 = vmatprep.subr.bf16.mxu0 0
      %243 = vmatpush1.bf16.msra.mxu0 0
      %244 = vmatprep.subr.bf16.mxu0 0
      %245 = vmatpush1.bf16.msra.mxu0 0
      %246 = vmatprep.subr.bf16.mxu0 0
      %247 = vmatpush1.bf16.msra.mxu0 0
      %248 = vmatprep.subr.bf16.mxu0 0
      %249 = vmatpush1.bf16.msra.mxu0 0
      %250 = vmatprep.subr.bf16.mxu0 0
      %251 = vmatpush1.bf16.msra.mxu0 0
      %252 = vmatprep.subr.bf16.mxu0 0
      %253 = vmatpush1.bf16.msra.mxu0 0
      %254 = vmatprep.subr.bf16.mxu0 0
      %255 = vmatpush1.bf16.msra.mxu0 0
      %256 = vmatprep.subr.bf16.mxu0 0
      %257 = vmatpush1.bf16.msra.mxu0 0
      %258 = vmatprep.mubr.bf16.mxu0 0
      %259 = vmatmul.mubr.bf16.gmra.mrb[0].mxu0 %v154
      %v260 = vpop.f32.mrb[0].mxu0
      %v261 = vadd.f32 %v176, %v260
      %v262 = vpop.f32.mrb[0].mxu0
      %v263 = vpop.f32.mrb[0].mxu0
      %v264 = vpop.f32.mrb[0].mxu0
      %265 = vdwg.mxu0
      %v266 = vadd.f32 %v261, %v148
      %267 = vadd.xlane.f32.xlu0 %v266
      %v268 = vpop.xlane.xlu0 %267
      %v269 = vmul.f32 %v266, %v266
      %270 = vadd.xlane.f32.xlu0 %v269
      %v271 = vpop.xlane.xlu0 %270
      %v272 = vmul.f32 %v268, 0.0078125
      %v273 = vmul.f32 %v271, 0.0078125
      %v274 = vmul.f32 %v272, %v272
      %v275 = vsub.f32 %v273, %v274
      %v276 = vsub.f32 %v266, %v272
      %v277 = vadd.f32 %v275, 1e-05
      %v278 = vrsqrt.pop %v277
      %v279 = vmul.f32 %v276, %v278
      %v280 = vld [vmem:[%s5] sm:$0x1]
      %v282 = vlaneseq
      %v283 = vshrl.u32 %v282, 7
      %v284 = vsub.s32 0, %v283
      %v285 = vrot.slane %v280, %v284
      %v287 = vmul.f32 %v279, %v285
      %v288 = vld [vmem:[%s6] sm:$0x1]
      %v290 = vlaneseq
      %v291 = vshrl.u32 %v290, 7
      %v292 = vsub.s32 0, %v291
      %v293 = vrot.slane %v288, %v292
      %v295 = vadd.f32 %v287, %v293
      %296 = vst [vmem:[#allocation9] sm:$0xff] %v295
    $region49: #{tpu_custom_call.1} parent=1 // pred_fallthru
      _
    // Predicated region
    $region50: #{tpu_custom_call.1} parent=1 // pred_check
      _
    $region51: #{tpu_custom_call.1} parent=1 // pred_check_branch
      %298 = sbr.rel (0) target = $region53
    $region52: #{tpu_custom_call.1} parent=1 // pred_region
      %s300 = ssub.s32 128, 128
      %301 = vsyncadd [#allocation5], %s300
      %s303 = sshll.u32 [#allocation9], 4
      %s304 = int_to_ptr.vmem [resolvable:$true] %s303
      %306 = dma.vmem_to_hbm [thread:$0]  %s304, 128, %s7, [#allocation5]
    $region53: #{tpu_custom_call.1} parent=1 // pred_fallthru
      _
    // Predicated region
    $region54: #{tpu_custom_call.1} parent=1 // pred_check
      _
    $region55: #{tpu_custom_call.1} parent=1 // pred_check_branch
      %308 = sbr.rel (0) target = $region57
    $region56: #{tpu_custom_call.1} parent=1 // pred_region
      %309 = dma.done [#allocation5], 128
    $region57: #{tpu_custom_call.1} parent=1 // pred_fallthru
      _
    %310 = vsyncpa [#allocation4], 1
    %311 = vsyncpa [#allocation7], 1
    %312 = vsyncpa [#allocation5], 1

</llo_original>
